<compile_context>
chip_gen: v5e
topology: v5e:2x2
jax: 0.10.0
libtpu: 0.0.40
codegen_flags: <defaults>
</compile_context>

<pallas_src>
import functools

import jax
import jax.numpy as jnp
from jax.experimental import pallas as pl
from jax.experimental.pallas import tpu as pltpu


def _round_up(x: int, m: int) -> int:
    return ((x + m - 1) // m) * m


def _gather_rows(idx_smem, table_ref, logits_ref, block_n: int):
    """logits[i, :] = table[idx[row0 + i], :] for i in [0, block_n)."""
    row0 = pl.program_id(0) * block_n

    def body(i, carry):
        tok = idx_smem[row0 + i]                          # scalar SMEM read
        logits_ref[pl.ds(i, 1), :] = table_ref[pl.ds(tok, 1), :]
        return carry

    jax.lax.fori_loop(0, block_n, body, 0)


def bigram_logits_kernel(idx_smem, table_ref, logits_ref, *, block_n: int):
    """Inference path: pure embedding row gather (no MXU, no VALU passes)."""
    _gather_rows(idx_smem, table_ref, logits_ref, block_n)


def bigram_fused_kernel(idx_smem, tgt_ref, table_ref, logits_ref, part_ref,
                        *, block_n: int, n_true: int):
    """Training path: row-copy gather + per-row cross-entropy + per-block loss partial.

    idx_smem  : (N_pad,) int32 in SMEM (scalar prefetch)
    tgt_ref   : (block_n, 1) int32 in VMEM
    table_ref : (V, V) f32 in VMEM (resident across the grid)
    logits_ref: (block_n, V) f32 output block
    part_ref  : (8, 128) f32 output block; whole block filled with this block's loss sum
    """
    _gather_rows(idx_smem, table_ref, logits_ref, block_n)

    logits = logits_ref[...]                              # (block_n, V) f32
    v = logits.shape[-1]
    col = jax.lax.broadcasted_iota(jnp.int32, (block_n, v), 1)
    row = jax.lax.broadcasted_iota(jnp.int32, (block_n, 1), 0)

    # log-sum-exp over the vocabulary (row-wise, XLU reductions + EUP exp/log).
    m = jnp.max(logits, axis=-1, keepdims=True)
    lse = m + jnp.log(jnp.sum(jnp.exp(logits - m), axis=-1, keepdims=True))

    # Target logit via a single broadcast compare + multiply-reduce.
    tgt_mask = (col == tgt_ref[...]).astype(jnp.float32)  # (block_n, V)
    tgt_logit = jnp.sum(tgt_mask * logits, axis=-1, keepdims=True)

    # Mask padded tail rows; accumulate this block's loss sum.
    row0 = pl.program_id(0) * block_n
    valid = (row0 + row) < n_true
    per_row = jnp.where(valid, lse - tgt_logit, 0.0)
    block_sum = jnp.sum(per_row)
    part_ref[...] = jnp.broadcast_to(block_sum, part_ref.shape)


def bigram_forward(idx, table, targets=None, *, block_n: int = 1024):
    """Pallas equivalent of BigramLanguageModel.forward."""
    B, T = idx.shape
    V = table.shape[0]
    N = B * T

    # Block size: multiple of 8, no larger than the (8-rounded) problem size.
    block_n = max(8, min(_round_up(block_n, 8), _round_up(N, 8)))
    num_blocks = pl.cdiv(N, block_n)
    n_pad = num_blocks * block_n

    idx_flat = jnp.pad(idx.reshape(N).astype(jnp.int32), (0, n_pad - N))

    if targets is None:
        grid_spec = pltpu.PrefetchScalarGridSpec(
            num_scalar_prefetch=1,
            grid=(num_blocks,),
            in_specs=[
                pl.BlockSpec((V, V), lambda b, idx_sm: (0, 0)),       # table (resident)
            ],
            out_specs=pl.BlockSpec((block_n, V), lambda b, idx_sm: (b, 0)),
        )
        logits_pad = pl.pallas_call(
            functools.partial(bigram_logits_kernel, block_n=block_n),
            out_shape=jax.ShapeDtypeStruct((n_pad, V), jnp.float32),
            grid_spec=grid_spec,
            compiler_params=pltpu.CompilerParams(
                dimension_semantics=("parallel",)),
        )(idx_flat, table)
        return logits_pad[:N].reshape(B, T, V), None

    tgt_col = jnp.pad(targets.reshape(N).astype(jnp.int32),
                      (0, n_pad - N)).reshape(n_pad, 1)

    grid_spec = pltpu.PrefetchScalarGridSpec(
        num_scalar_prefetch=1,
        grid=(num_blocks,),
        in_specs=[
            pl.BlockSpec((block_n, 1), lambda b, idx_sm: (b, 0)),     # targets column
            pl.BlockSpec((V, V), lambda b, idx_sm: (0, 0)),           # table (resident)
        ],
        out_specs=(
            pl.BlockSpec((block_n, V), lambda b, idx_sm: (b, 0)),     # logits
            pl.BlockSpec((8, 128), lambda b, idx_sm: (b, 0)),         # per-block loss partial
        ),
    )
    logits_pad, partials = pl.pallas_call(
        functools.partial(bigram_fused_kernel, block_n=block_n, n_true=N),
        out_shape=(
            jax.ShapeDtypeStruct((n_pad, V), jnp.float32),
            jax.ShapeDtypeStruct((num_blocks * 8, 128), jnp.float32),
        ),
        grid_spec=grid_spec,
        compiler_params=pltpu.CompilerParams(
            dimension_semantics=("parallel",)),
    )(idx_flat, tgt_col, table)

    # Each (8, 128) partial block is uniformly filled with that block's loss sum.
    block_sums = partials.reshape(num_blocks, -1)[:, 0]
    loss = jnp.sum(block_sums) / N
    return logits_pad[:N].reshape(B, T, V), loss


def _ref_loss(table, idx, targets):
    B, T = idx.shape
    V = table.shape[0]
    lf = table[idx].reshape(B * T, V)
    tf = targets.reshape(-1)
    lse = jax.scipy.special.logsumexp(lf, axis=-1)
    return jnp.mean(lse - lf[jnp.arange(B * T), tf])


if __name__ == "__main__":
    VOCAB = 128   # vocabulary_size (lane-aligned for TPU)
    B, T = 2, 8

    key = jax.random.PRNGKey(0)
    k_tab, k_idx, k_tgt, k_idx2, k_tgt2 = jax.random.split(key, 5)

    # nn.Embedding(vocabulary_size, vocabulary_size) weight ~ N(0, 1)
    table = jax.random.normal(k_tab, (VOCAB, VOCAB), dtype=jnp.float32)
    idx = jax.random.randint(k_idx, (B, T), 0, VOCAB, dtype=jnp.int32)
    targets = jax.random.randint(k_tgt, (B, T), 0, VOCAB, dtype=jnp.int32)

    # --- Inference path (loss is None), small block_n to exercise the grid ---
    logits, loss = bigram_forward(idx, table, block_n=8)
    logits = jax.block_until_ready(logits)
    assert loss is None
    assert logits.shape == (B, T, VOCAB) and logits.dtype == jnp.float32
    ref_logits = table[idx]
    assert jnp.allclose(logits, ref_logits, atol=1e-5), "logits mismatch"

    # --- Training path (fused gather + cross-entropy) ---
    logits2, loss2 = bigram_forward(idx, table, targets, block_n=8)
    logits2 = jax.block_until_ready(logits2)
    loss2 = jax.block_until_ready(loss2)
    assert jnp.allclose(logits2, ref_logits, atol=1e-5), "fused logits mismatch"
    assert jnp.allclose(loss2, _ref_loss(table, idx, targets), atol=1e-4), "loss mismatch"

    # --- Tail-block path: N not a multiple of block_n (masked rows, true-N mean) ---
    B2, T2 = 3, 5   # N = 15, block_n = 8 -> one padded row
    idx_t = jax.random.randint(k_idx2, (B2, T2), 0, VOCAB, dtype=jnp.int32)
    tgt_t = jax.random.randint(k_tgt2, (B2, T2), 0, VOCAB, dtype=jnp.int32)
    logits3, loss3 = bigram_forward(idx_t, table, tgt_t, block_n=8)
    logits3 = jax.block_until_ready(logits3)
    loss3 = jax.block_until_ready(loss3)
    assert jnp.allclose(logits3, table[idx_t], atol=1e-5), "tail logits mismatch"
    assert jnp.allclose(loss3, _ref_loss(table, idx_t, tgt_t), atol=1e-4), "tail loss mismatch"

    print("KERNEL_OK")
</pallas_src>

<mosaic_0001>
module attributes {stable_mosaic.version = 11 : i64} {
  func.func @bigram_logits_kernel(%arg0: i32, %arg1: memref<16xi32, #tpu.memory_space<smem>>, %arg2: memref<128x128xf32, #tpu.memory_space<vmem>>, %arg3: memref<8x128xf32, #tpu.memory_space<vmem>>) attributes {dimension_semantics = [#tpu.dimension_semantics<parallel>], iteration_bounds = array<i64: 2>, scalar_prefetch = 1 : i64, scratch_operands = 0 : i64, tpu.core_type = #tpu.core_type<tc>, window_params = [{pipeline_mode = #tpu.pipeline_mode<synchronous>, transform_indices = @transform_0, window_bounds = array<i64: 128, 128>}, {transform_indices = @transform_1, window_bounds = array<i64: 8, 128>}]} {
    %c8_i32 = arith.constant 8 : i32
    %0 = arith.muli %arg0, %c8_i32 : i32
    %c0_i32 = arith.constant 0 : i32
    %c8_i32_0 = arith.constant 8 : i32
    %1 = arith.addi %c0_i32, %c8_i32_0 : i32
    %c1_i32 = arith.constant 1 : i32
    scf.for %arg4 = %c0_i32 to %1 step %c1_i32  : i32 {
      %2 = arith.addi %0, %arg4 : i32
      %3 = arith.index_cast %2 : i32 to index
      %4 = memref.load %arg1[%3] : memref<16xi32, #tpu.memory_space<smem>>
      %5 = arith.index_cast %4 : i32 to index
      %c0 = arith.constant 0 : index
      %6 = vector.load %arg2[%5, %c0] : memref<128x128xf32, #tpu.memory_space<vmem>>, vector<1x128xf32>
      %7 = arith.index_cast %arg4 : i32 to index
      %c0_2 = arith.constant 0 : index
      %8 = vector.load %arg3[%7, %c0_2] : memref<8x128xf32, #tpu.memory_space<vmem>>, vector<1x128xf32>
      tpu.vector_store %arg3[%7, %c0_2], %6 {strides = array<i32>} : memref<8x128xf32, #tpu.memory_space<vmem>>, vector<1x128xf32>,
    }
    %c8_i32_1 = arith.constant 8 : i32
    return
  }
  func.func @transform_0(%arg0: i32, %arg1: memref<16xi32, #tpu.memory_space<smem>>) -> (i32, i32) {
    %c0_i32 = arith.constant 0 : i32
    %c0_i32_0 = arith.constant 0 : i32
    %c0_i32_1 = arith.constant 0 : i32
    return %c0_i32, %c0_i32_0 : i32, i32
  }
  func.func @transform_1(%arg0: i32, %arg1: memref<16xi32, #tpu.memory_space<smem>>) -> (i32, i32) {
    %c0_i32 = arith.constant 0 : i32
    %c0_i32_0 = arith.constant 0 : i32
    return %arg0, %c0_i32 : i32, i32
  }
}

</mosaic_0001>

<llo_original>
// kernel: tpu_custom_call.1
$region0: #{tpu_custom_call.1}
  #allocation0 [shape = 'u32[]', space=smem, size = 0x4, offset = 0x4, fixed_abs, tag = 'smem constant byte address 0x4 - core index']
  #allocation1 [shape = 'u32[72,128]{1,0:T(1,128)}', space=vmem, size = 0x9000, scoped, tag = 'internal scratch']
  #allocation2 [shape = 's32[1]{0}', space=sflag, size = 0x4, scoped, tag = 'scoped memory for tpu_custom_call.1']
  #allocation3 [shape = 'u8[512]{0}', space=smem, size = 0x200, scoped, tag = 'prefetched SMEM operand 0']
  %s0 = inlined_call_operand.hbm [shape: s32[16], index: 0, kind: input, shape index: {}]
  %s1 = inlined_call_operand.hbm [shape: f32[128,128], index: 1, kind: input, shape index: {}]
  %s2 = inlined_call_operand.hbm [shape: f32[16,128], index: 2, kind: output, shape index: {}]
  %s3 = sld [smem:[#allocation0]]
  $region48: #{tpu_custom_call.1} parent=0
    _
  %s5 = ssub.s32 1, %s3
  %s6 = scalar_select 0, %s5, %s3
  %s8 = sshll.u32 %s0, 4
  %s9 = int_to_ptr.hbm [resolvable:$true] %s8
  %11 = dma.hbm_to_smem %s9, 16, [#allocation3], [#allocation2]
  %13 = dma.done [#allocation2], 16
  %14 = sfence
  $region1: #{tpu_custom_call.1} parent=0
    #allocation4 [shape = 'u8[65536]{0}', space=vmem, size = 0x10000, scoped, tag = 'input window, operand 1, single buffered']
    #allocation5 [shape = 's32[2]{0}', space=sflag, size = 0x8, scoped, tag = 'scoped memory for tpu_custom_call.1']
    #allocation6 [shape = 's32[2]{0}', space=sflag, size = 0x8, scoped, tag = 'scoped memory for tpu_custom_call.1']
    #allocation7 [shape = 'u8[8192]{0}', space=vmem, size = 0x2000, scoped, tag = 'output window, operand 0']
    %15 = vsyncpa [#allocation5], 0
    %16 = vsyncpa [#allocation6], 0
    %s17 = scalar_lea.sflag [#allocation6], 1
    %18 = vsyncpa %s17, 0
    loop: start=0, step=1, limit=4
    $region2: #{tpu_custom_call.1} parent=1 // loop_pre_header
      _
    $region3: #{tpu_custom_call.1} parent=1 // loop_header
      %s20 = sphi 0, %s24
      %p21 = scmp.ge.s32.totalorder %s20, 4
      %s28 = sphi 0, %s28
      %s30 = sphi 0, %s28
      %s31 = sphi 0, %s30
      %s45 = sphi 0, %s31
      %s51 = sphi 0, %s53
      %s54 = sphi 0, %s51
      %s55 = sphi 0, %s54
      %s71 = sphi 0, %s55
    $region4: #{tpu_custom_call.1} parent=1 // loop_header_branch
      %23 = sbr.rel (%p21) target = $region8
    $region5: #{tpu_custom_call.1} parent=1 // loop_body
      %s25 = ssub.s32 %s20, 1
      %s26 = ssub.s32 %s20, 2
      %s27 = sadd.s32 %s20, 1
      %s29 = sadd.s32 %s28, 1
      %p32 = scmp.eq.s32.totalorder %s20, 1
      %p33 = scmp.ne.s32.totalorder %s28, %s30
      %p34 = scmp.eq.s32.totalorder %s20, 0
      %p35 = por %p33, %p34
      %p36 = scmp.ne.s32.totalorder %s28, %s30
      %p37 = scmp.eq.s32.totalorder %s25, 1
      %p38 = por %p36, %p37
      %p39 = scmp.ne.s32.totalorder %s30, %s31
      %p40 = scmp.eq.s32.totalorder %s25, 0
      %p41 = por %p39, %p40
      %p42 = scmp.ne.s32.totalorder %s30, %s31
      %p43 = scmp.eq.s32.totalorder %s26, 1
      %p44 = por %p42, %p43
      %p46 = scmp.ne.s32.totalorder %s31, %s45
      %p47 = scmp.eq.s32.totalorder %s26, 0
      %p48 = por %p46, %p47
      %s49 = ssub.s32 %s20, %s27
      %p50 = scmp.eq.s32.totalorder %s49, 0
      %s52 = sadd.s32 %s51, 1
      %s53 = scalar_select %p50, %s51, %s52
      %p56 = pneg %p50
      %p57 = scmp.eq.s32.totalorder %s20, 1
      %p58 = por %p56, %p57
      %p59 = scmp.ne.s32.totalorder %s51, %s54
      %p60 = scmp.eq.s32.totalorder %s20, 0
      %p61 = por %p59, %p60
      %p62 = scmp.ne.s32.totalorder %s51, %s54
      %p63 = scmp.eq.s32.totalorder %s25, 1
      %p64 = por %p62, %p63
      %p65 = scmp.ne.s32.totalorder %s54, %s55
      %p66 = scmp.eq.s32.totalorder %s25, 0
      %p67 = por %p65, %p66
      %p68 = scmp.ne.s32.totalorder %s54, %s55
      %p69 = scmp.eq.s32.totalorder %s26, 1
      %p70 = por %p68, %p69
      %p72 = scmp.ne.s32.totalorder %s55, %s71
      %p73 = scmp.eq.s32.totalorder %s26, 0
      %p74 = por %p72, %p73
      %p75 = scmp.le.s32.totalorder 1, %s20
      %p76 = scmp.lt.s32.totalorder %s20, 3
      %p77 = pnand %p75, %p76
      %p78 = pneg %p77
      // Predicated region
      $region9: #{tpu_custom_call.1} parent=5 // pred_check
        _
      $region10: #{tpu_custom_call.1} parent=5 // pred_check_branch
        %80 = sbr.rel (%p77) target = $region12
      $region11: #{tpu_custom_call.1} parent=5 // pred_region
        %s81 = ssub.s32 %s20, 1
        // Predicated region
        $region13: #{tpu_custom_call.1} parent=11 // pred_check
          %p82 = pneg %p41
        $region14: #{tpu_custom_call.1} parent=11 // pred_check_branch
          %84 = sbr.rel (%p82) target = $region16
        $region15: #{tpu_custom_call.1} parent=11 // pred_region
          %86 = vsyncadd [#allocation5], 0
          %s87 = sshll.u32 %s1, 4
          %s88 = int_to_ptr.hbm [resolvable:$true] %s87
          %s89 = sshll.u32 [#allocation4], 4
          %s90 = int_to_ptr.vmem [resolvable:$true] %s89
          %95 = dma.hbm_to_vmem [thread:$0]  %s88, 2048, %s90, [#allocation5], 128, 128, 8
        $region16: #{tpu_custom_call.1} parent=11 // pred_fallthru
          _
      $region12: #{tpu_custom_call.1} parent=5 // pred_fallthru
        _
      %p96 = scmp.lt.s32.totalorder %s20, 2
      // Predicated region
      $region17: #{tpu_custom_call.1} parent=5 // pred_check
        %p97 = pneg %p96
      $region18: #{tpu_custom_call.1} parent=5 // pred_check_branch
        %99 = sbr.rel (%p97) target = $region20
      $region19: #{tpu_custom_call.1} parent=5 // pred_region
        _
      $region20: #{tpu_custom_call.1} parent=5 // pred_fallthru
        _
      %p100 = scmp.le.s32.totalorder 1, %s20
      %p101 = scmp.lt.s32.totalorder %s20, 3
      %p102 = pnand %p100, %p101
      %p103 = pneg %p102
      // Predicated region
      $region21: #{tpu_custom_call.1} parent=5 // pred_check
        _
      $region22: #{tpu_custom_call.1} parent=5 // pred_check_branch
        %105 = sbr.rel (%p102) target = $region24
      $region23: #{tpu_custom_call.1} parent=5 // pred_region
        %s106 = ssub.s32 %s20, 1
        // Predicated region
        $region25: #{tpu_custom_call.1} parent=23 // pred_check
          %p107 = pneg %p41
        $region26: #{tpu_custom_call.1} parent=23 // pred_check_branch
          %109 = sbr.rel (%p107) target = $region28
        $region27: #{tpu_custom_call.1} parent=23 // pred_region
          %111 = dma.done [#allocation5], 2048
        $region28: #{tpu_custom_call.1} parent=23 // pred_fallthru
          _
        %p112 = pneg %p41
        %p113 = pneg %p38
        %p114 = pneg %p67
        %p115 = pneg %p64
        %s116 = sand.u32 %s54, 1
        %s117 = scalar_lea.sflag [#allocation6], %s116
        %s118 = sand.u32 %s54, 1
        %s119 = smul.addr %s118, 8
        %s120 = scalar_lea.vmem [#allocation7], %s119
        %s121 = smul.u32 %s25, 8
        loop: start=0, step=1, limit=8
        $region29: #{tpu_custom_call.1} parent=23 // loop_pre_header
          _
        $region30: #{tpu_custom_call.1} parent=23 // loop_header
          %s123 = sphi 0, %s127
          %p124 = scmp.ge.s32.totalorder %s123, 8
        $region31: #{tpu_custom_call.1} parent=23 // loop_header_branch
          %126 = sbr.rel (%p124) target = $region35
        $region32: #{tpu_custom_call.1} parent=23 // loop_body
          %s128 = sadd.s32 %s121, %s123
          %s129 = sld [smem:[#allocation3 + %s128]]
          %s130 = scalar_lea.vmem [#allocation4], %s129
          %v131 = vld [vmem:[%s130] sm:$0x1]
          %s132 = scalar_lea.vmem %s120, %s123 [#allocation7]
          %133 = vst [vmem:[%s132] sm:$0x1] %v131
        $region33: #{tpu_custom_call.1} parent=23 // loop_footer
          %s127 = sadd.s32 1, %s123
        $region34: #{tpu_custom_call.1} parent=23 // loop_footer_branch
          %122 = sbr.rel target = $region30
        $region35: #{tpu_custom_call.1} parent=23 // loop_exit
          _
        %s134 = sand.u32 %s54, 1
        %s135 = scalar_lea.sflag [#allocation6], %s134
        %s136 = sand.u32 %s54, 1
        %s137 = smul.addr %s136, 8
        %s138 = scalar_lea.vmem [#allocation7], %s137
        // Predicated region
        $region36: #{tpu_custom_call.1} parent=23 // pred_check
          %p139 = pneg %p64
        $region37: #{tpu_custom_call.1} parent=23 // pred_check_branch
          %141 = sbr.rel (%p139) target = $region39
        $region38: #{tpu_custom_call.1} parent=23 // pred_region
          %143 = vsyncadd %s135, 0
          %s144 = smul.addr %s25, 8
          %s145 = scalar_lea.hbm %s2, %s144
          %s147 = sshll.u32 %s138, 4
          %s148 = int_to_ptr.vmem [resolvable:$true] %s147
          %s149 = sshll.u32 %s145, 4
          %s150 = int_to_ptr.hbm [resolvable:$true] %s149
          %152 = dma.vmem_to_hbm [thread:$0]  %s148, 128, %s150, %s135
        $region39: #{tpu_custom_call.1} parent=23 // pred_fallthru
          _
      $region24: #{tpu_custom_call.1} parent=5 // pred_fallthru
        _
      %p153 = scmp.le.s32.totalorder 2, %s20
      // Predicated region
      $region40: #{tpu_custom_call.1} parent=5 // pred_check
        %p154 = pneg %p153
      $region41: #{tpu_custom_call.1} parent=5 // pred_check_branch
        %156 = sbr.rel (%p154) target = $region43
      $region42: #{tpu_custom_call.1} parent=5 // pred_region
        %s157 = ssub.s32 %s20, 2
        // Predicated region
        $region44: #{tpu_custom_call.1} parent=42 // pred_check
          %p158 = pneg %p70
        $region45: #{tpu_custom_call.1} parent=42 // pred_check_branch
          %160 = sbr.rel (%p158) target = $region47
        $region46: #{tpu_custom_call.1} parent=42 // pred_region
          %s161 = sand.u32 %s55, 1
          %s162 = scalar_lea.sflag [#allocation6], %s161
          %s163 = sand.u32 %s55, 1
          %s164 = smul.addr %s163, 8
          %s165 = scalar_lea.vmem [#allocation7], %s164
          %167 = dma.done %s162, 128
        $region47: #{tpu_custom_call.1} parent=42 // pred_fallthru
          _
      $region43: #{tpu_custom_call.1} parent=5 // pred_fallthru
        _
    $region6: #{tpu_custom_call.1} parent=1 // loop_footer
      %s24 = sadd.s32 1, %s20
    $region7: #{tpu_custom_call.1} parent=1 // loop_footer_branch
      %19 = sbr.rel target = $region3
    $region8: #{tpu_custom_call.1} parent=1 // loop_exit
      _
    %168 = vsyncpa [#allocation5], 1
    %s169 = scalar_lea.sflag [#allocation5], 1
    %170 = vsyncpa %s169, 1
    %171 = vsyncpa [#allocation6], 1
    %s172 = scalar_lea.sflag [#allocation6], 1
    %173 = vsyncpa %s172, 1

</llo_original>
